<compile_context>
chip_gen: v6e
topology: v6e:2x2x1
jax: 0.10.0
libtpu: 0.0.40
codegen_flags: <defaults>
</compile_context>

<pallas_src>
import functools
import math

import jax
import jax.numpy as jnp
import numpy as np
from jax.experimental import pallas as pl
from jax.experimental.pallas import tpu as pltpu


def _gating_kernel(x1_ref, x2_ref,
                   wq_ref, bq_ref, wkv_ref, bkv_ref, wg_ref, bg_ref,
                   out_ref, *, dim, reduce_token):
    """One grid step = TB batch elements. All refs live in VMEM.

    x1_ref : (TB, S1, D)  bf16      x2_ref : (TB, S2, D)  bf16
    wq_ref : (D, D)   bf16          bq_ref : (1, D)   f32
    wkv_ref: (D, 2D)  bf16 (K|V)    bkv_ref: (1, 2D)  f32
    wg_ref : (D, Gp)  bf16 (padded) bg_ref : (1, Gp)  f32 (-1e30 in padded lanes)
    out_ref: (TB, S1, Gp) f32, or (TB, 1, Gp) when reduce_token.
    """
    TB, S1, D = x1_ref.shape
    S2 = x2_ref.shape[1]
    Gp = wg_ref.shape[1]

    x1 = x1_ref[...]
    x2 = x2_ref[...]

    # Q projection over all TB*S1 rows at once (bf16 operands, f32 accumulation).
    q = (jnp.dot(x1.reshape(TB * S1, D), wq_ref[...],
                 preferred_element_type=jnp.float32)
         + bq_ref[0]).reshape(TB, S1, D)

    # Fused K|V projection: a single MXU pass over x2, then split.
    kv = (jnp.dot(x2.reshape(TB * S2, D), wkv_ref[...],
                  preferred_element_type=jnp.float32)
          + bkv_ref[0]).reshape(TB, S2, 2 * D)
    k = kv[:, :, :D]
    v = kv[:, :, D:]

    # attention_scores = softmax(Q K^T / sqrt(dim)): batched contraction over the last
    # dims (lowered as dot_general with batch dims; no explicit transpose of K).
    scores = jnp.einsum("bqd,bkd->bqk",
                        q.astype(jnp.bfloat16), k.astype(jnp.bfloat16),
                        preferred_element_type=jnp.float32) * (1.0 / math.sqrt(dim))
    scores = scores - jnp.max(scores, axis=-1, keepdims=True)
    p = jnp.exp(scores)
    attn = p * pl.reciprocal(jnp.sum(p, axis=-1, keepdims=True), approx=True)
    # nn.Dropout is identity at inference time (eval mode); nothing to do.
    # TODO(synk): training-mode dropout (stateful PRNG mask) not implemented.

    v_bf = v.astype(jnp.bfloat16)
    if reduce_token:
        # mean over queries commutes through attn @ V and the gate projection:
        # mean_q(attn @ V) == mean_q(attn) @ V   (S1x fewer MXU FLOPs)
        attn_mean = jnp.mean(attn, axis=1, keepdims=True)                 # (TB, 1, S2)
        ctx = jnp.einsum("bqk,bkd->bqd", attn_mean.astype(jnp.bfloat16), v_bf,
                         preferred_element_type=jnp.float32)[:, 0, :]     # (TB, D)
        gates = jnp.dot(ctx.astype(jnp.bfloat16), wg_ref[...],
                        preferred_element_type=jnp.float32) + bg_ref[0]   # (TB, Gp)
    else:
        ctx = jnp.einsum("bqk,bkd->bqd", attn.astype(jnp.bfloat16), v_bf,
                         preferred_element_type=jnp.float32)              # (TB, S1, D)
        gates = jnp.dot(ctx.reshape(TB * S1, D).astype(jnp.bfloat16), wg_ref[...],
                        preferred_element_type=jnp.float32) + bg_ref[0]   # (TB*S1, Gp)

    # Gate softmax over the lane-dense padded width: padded columns carry a -1e30 bias,
    # so exp(..) == 0 there and the first G columns equal the true softmax.
    gates = gates - jnp.max(gates, axis=-1, keepdims=True)
    eg = jnp.exp(gates)
    sm = eg * pl.reciprocal(jnp.sum(eg, axis=-1, keepdims=True), approx=True)

    if reduce_token:
        out_ref[...] = sm.reshape(TB, 1, Gp)
    else:
        out_ref[...] = sm.reshape(TB, S1, Gp)


def _pick_tb(B, S1, S2, D, Gp, budget_bytes=4 * 1024 * 1024):
    """Batch-tile size: pack as many batch elements per grid step as comfortably fit
    a few-MiB VMEM budget, while keeping >= 2 grid steps so both v7x TCs get work."""
    per_b = 4 * (S1 * D + 3 * S2 * D + S1 * S2 + S1 * D + S1 * Gp)  # f32 upper bound
    tb = max(1, min(B, budget_bytes // max(per_b, 1)))
    if tb >= B and B > 1:          # keep at least 2 grid steps (megacore sharding)
        tb = max(1, B // 2)
    while tb > 1 and B % tb != 0:  # must divide the batch
        tb -= 1
    return tb


def cross_attention_gating(input1, input2, params, reduce_token=False, tb=None):
    """Pallas implementation of CrossAttentionBasedGating.forward (inference)."""
    B, S1, D = input1.shape
    B2, S2, D2 = input2.shape
    assert B == B2 and D == D2
    G = params["wg"].shape[1]
    Gp = ((G + 127) // 128) * 128            # lane-dense (unmasked vst) output width

    if tb is None:
        tb = _pick_tb(B, S1, S2, D, Gp)
    assert B % tb == 0
    grid = (B // tb,)

    f32, bf16 = jnp.float32, jnp.bfloat16

    # bf16 operands for the MXU (f32 accumulation inside the kernel); biases stay f32.
    x1 = input1.astype(bf16)
    x2 = input2.astype(bf16)
    wq = params["wq"].astype(bf16)
    wkv = jnp.concatenate([params["wk"], params["wv"]], axis=1).astype(bf16)   # (D, 2D)
    bq = params["bq"].reshape(1, D).astype(f32)
    bkv = jnp.concatenate([params["bk"], params["bv"]]).reshape(1, 2 * D).astype(f32)
    # Gate projection padded to Gp lanes; padded bias = -1e30 -> vanishes under softmax.
    wg = jnp.zeros((D, Gp), bf16).at[:, :G].set(params["wg"].astype(bf16))
    bg = jnp.full((1, Gp), -1e30, f32).at[0, :G].set(params["bg"].astype(f32))

    fixed2 = lambda b: (0, 0)
    in_specs = [
        pl.BlockSpec((tb, S1, D), lambda b: (b, 0, 0)),   # x1
        pl.BlockSpec((tb, S2, D), lambda b: (b, 0, 0)),   # x2
        pl.BlockSpec((D, D), fixed2),                     # Wq
        pl.BlockSpec((1, D), fixed2),                     # bq
        pl.BlockSpec((D, 2 * D), fixed2),                 # Wk | Wv (fused)
        pl.BlockSpec((1, 2 * D), fixed2),                 # bk | bv (fused)
        pl.BlockSpec((D, Gp), fixed2),                    # Wg (lane-padded)
        pl.BlockSpec((1, Gp), fixed2),                    # bg (lane-padded)
    ]

    if reduce_token:
        out_shape = jax.ShapeDtypeStruct((B, 1, Gp), f32)
        out_specs = pl.BlockSpec((tb, 1, Gp), lambda b: (b, 0, 0))
    else:
        out_shape = jax.ShapeDtypeStruct((B, S1, Gp), f32)
        out_specs = pl.BlockSpec((tb, S1, Gp), lambda b: (b, 0, 0))

    # Advisory cost estimate so XLA schedules surrounding ops sensibly.
    out_rows = 1 if reduce_token else S1
    flops = 2 * B * (S1 * D * D + S2 * D * 2 * D + S1 * S2 * D
                     + out_rows * S2 * D + out_rows * D * Gp)
    transcendentals = B * (S1 * S2 + out_rows * Gp)
    bytes_accessed = ((x1.size + x2.size + wq.size + wkv.size + wg.size) * 2
                      + (bq.size + bkv.size + bg.size) * 4
                      + B * out_rows * Gp * 4)

    kernel = functools.partial(_gating_kernel, dim=D, reduce_token=reduce_token)

    out = pl.pallas_call(
        kernel,
        out_shape=out_shape,
        grid_spec=pltpu.PrefetchScalarGridSpec(
            num_scalar_prefetch=0,
            grid=grid,
            in_specs=in_specs,
            out_specs=out_specs,
        ),
        compiler_params=pltpu.CompilerParams(
            dimension_semantics=("parallel",),
            vmem_limit_bytes=32 * 1024 * 1024,   # explicit; safe on v5e/v6e/v7x scoped VMEM
        ),
        cost_estimate=pl.CostEstimate(
            flops=int(flops),
            transcendentals=int(transcendentals),
            bytes_accessed=int(bytes_accessed),
        ),
    )(x1, x2, wq, bq, wkv, bkv, wg, bg)

    # Strip the lane padding (and the singleton token axis for reduce_token).
    if reduce_token:
        return out[:, 0, :G]
    return out[:, :, :G]


def _reference(input1, input2, params, reduce_token=False):
    """Plain-JAX reference mirroring the PyTorch module (eval mode, f32)."""
    D = input1.shape[-1]
    q = input1 @ params["wq"] + params["bq"]
    k = input2 @ params["wk"] + params["bk"]
    v = input2 @ params["wv"] + params["bv"]
    scores = jnp.einsum("bqd,bkd->bqk", q, k) / math.sqrt(D)
    attn = jax.nn.softmax(scores, axis=-1)
    out = jnp.einsum("bqk,bkd->bqd", attn, v)
    if reduce_token:
        out = out.mean(axis=1)
    gates = out @ params["wg"] + params["bg"]
    return jax.nn.softmax(gates, axis=-1)


def _init_params(key, dim, num_gates):
    """Deterministic init matching nn.Linear shapes (stored transposed: [in, out])."""
    ks = jax.random.split(key, 8)
    bound_d = 1.0 / math.sqrt(dim)
    u = lambda k, shape, b: jax.random.uniform(k, shape, jnp.float32, -b, b)
    return {
        "wq": u(ks[0], (dim, dim), bound_d), "bq": u(ks[1], (dim,), bound_d),
        "wk": u(ks[2], (dim, dim), bound_d), "bk": u(ks[3], (dim,), bound_d),
        "wv": u(ks[4], (dim, dim), bound_d), "bv": u(ks[5], (dim,), bound_d),
        "wg": u(ks[6], (dim, num_gates), bound_d), "bg": u(ks[7], (num_gates,), bound_d),
    }


if __name__ == "__main__":
    B, S1, S2, D, G = 8, 8, 8, 32, 8   # num_heads=4 is unused by the forward pass

    key = jax.random.PRNGKey(0)
    k1, k2, kp = jax.random.split(key, 3)
    input1 = jax.random.normal(k1, (B, S1, D), jnp.float32)
    input2 = jax.random.normal(k2, (B, S2, D), jnp.float32)
    params = _init_params(kp, D, G)

    # reduce_token=False path (batch-tiled: TB=4 -> 2 grid steps)
    out = jax.block_until_ready(
        cross_attention_gating(input1, input2, params, reduce_token=False))
    ref = _reference(input1, input2, params, reduce_token=False)
    np.testing.assert_allclose(np.asarray(out), np.asarray(ref), rtol=2e-2, atol=2e-2)

    # reduce_token=True path
    out_r = jax.block_until_ready(
        cross_attention_gating(input1, input2, params, reduce_token=True))
    ref_r = _reference(input1, input2, params, reduce_token=True)
    np.testing.assert_allclose(np.asarray(out_r), np.asarray(ref_r), rtol=2e-2, atol=2e-2)

    print("KERNEL_OK")
</pallas_src>

<mosaic_0001>
module attributes {stable_mosaic.version = 11 : i64} {
  func.func @_gating_kernel(%arg0: i32, %arg1: memref<4x8x32xbf16, #tpu.memory_space<vmem>>, %arg2: memref<4x8x32xbf16, #tpu.memory_space<vmem>>, %arg3: memref<32x32xbf16, #tpu.memory_space<vmem>>, %arg4: memref<1x32xf32, #tpu.memory_space<vmem>>, %arg5: memref<32x64xbf16, #tpu.memory_space<vmem>>, %arg6: memref<1x64xf32, #tpu.memory_space<vmem>>, %arg7: memref<32x128xbf16, #tpu.memory_space<vmem>>, %arg8: memref<1x128xf32, #tpu.memory_space<vmem>>, %arg9: memref<4x8x128xf32, #tpu.memory_space<vmem>>) attributes {dimension_semantics = [#tpu.dimension_semantics<parallel>], iteration_bounds = array<i64: 2>, scalar_prefetch = 0 : i64, scratch_operands = 0 : i64, tpu.core_type = #tpu.core_type<tc>, window_params = [{transform_indices = @transform_0, window_bounds = array<i64: 4, 8, 32>}, {transform_indices = @transform_1, window_bounds = array<i64: 4, 8, 32>}, {pipeline_mode = #tpu.pipeline_mode<synchronous>, transform_indices = @transform_2, window_bounds = array<i64: 32, 32>}, {pipeline_mode = #tpu.pipeline_mode<synchronous>, transform_indices = @transform_3, window_bounds = array<i64: 1, 32>}, {pipeline_mode = #tpu.pipeline_mode<synchronous>, transform_indices = @transform_4, window_bounds = array<i64: 32, 64>}, {pipeline_mode = #tpu.pipeline_mode<synchronous>, transform_indices = @transform_5, window_bounds = array<i64: 1, 64>}, {pipeline_mode = #tpu.pipeline_mode<synchronous>, transform_indices = @transform_6, window_bounds = array<i64: 32, 128>}, {pipeline_mode = #tpu.pipeline_mode<synchronous>, transform_indices = @transform_7, window_bounds = array<i64: 1, 128>}, {transform_indices = @transform_8, window_bounds = array<i64: 4, 8, 128>}]} {
    %c0 = arith.constant 0 : index
    %c0_0 = arith.constant 0 : index
    %c0_1 = arith.constant 0 : index
    %0 = vector.load %arg1[%c0, %c0_0, %c0_1] : memref<4x8x32xbf16, #tpu.memory_space<vmem>>, vector<4x8x32xbf16>
    %c0_2 = arith.constant 0 : index
    %c0_3 = arith.constant 0 : index
    %c0_4 = arith.constant 0 : index
    %1 = vector.load %arg2[%c0_2, %c0_3, %c0_4] : memref<4x8x32xbf16, #tpu.memory_space<vmem>>, vector<4x8x32xbf16>
    %2 = vector.shape_cast %0 : vector<4x8x32xbf16> to vector<32x32xbf16>
    %c0_5 = arith.constant 0 : index
    %c0_6 = arith.constant 0 : index
    %3 = vector.load %arg3[%c0_5, %c0_6] : memref<32x32xbf16, #tpu.memory_space<vmem>>, vector<32x32xbf16>
    %cst = arith.constant dense<0.000000e+00> : vector<32x32xf32>
    %4 = tpu.matmul %2, %3, %cst {dimension_numbers = #tpu.dot_dimension_numbers<[1], [0], [0], [1], [0, 0, 1, 1], [], []>} : vector<32x32xbf16>, vector<32x32xbf16>, vector<32x32xf32> -> vector<32x32xf32>
    %c0_7 = arith.constant 0 : index
    %c0_8 = arith.constant 0 : index
    %5 = vector.load %arg4[%c0_7, %c0_8] : memref<1x32xf32, #tpu.memory_space<vmem>>, vector<1x32xf32>
    %6 = vector.shape_cast %5 : vector<1x32xf32> to vector<32xf32>
    %7 = vector.shape_cast %6 : vector<32xf32> to vector<1x32xf32>
    %8 = vector.broadcast %7 : vector<1x32xf32> to vector<32x32xf32>
    %9 = arith.addf %4, %8 : vector<32x32xf32>
    %10 = vector.shape_cast %9 : vector<32x32xf32> to vector<4x8x32xf32>
    %11 = vector.shape_cast %1 : vector<4x8x32xbf16> to vector<32x32xbf16>
    %c0_9 = arith.constant 0 : index
    %c0_10 = arith.constant 0 : index
    %12 = vector.load %arg5[%c0_9, %c0_10] : memref<32x64xbf16, #tpu.memory_space<vmem>>, vector<32x64xbf16>
    %cst_11 = arith.constant dense<0.000000e+00> : vector<32x64xf32>
    %13 = tpu.matmul %11, %12, %cst_11 {dimension_numbers = #tpu.dot_dimension_numbers<[1], [0], [0], [1], [0, 0, 1, 1], [], []>} : vector<32x32xbf16>, vector<32x64xbf16>, vector<32x64xf32> -> vector<32x64xf32>
    %c0_12 = arith.constant 0 : index
    %c0_13 = arith.constant 0 : index
    %14 = vector.load %arg6[%c0_12, %c0_13] : memref<1x64xf32, #tpu.memory_space<vmem>>, vector<1x64xf32>
    %15 = vector.shape_cast %14 : vector<1x64xf32> to vector<64xf32>
    %16 = vector.shape_cast %15 : vector<64xf32> to vector<1x64xf32>
    %17 = vector.broadcast %16 : vector<1x64xf32> to vector<32x64xf32>
    %18 = arith.addf %13, %17 : vector<32x64xf32>
    %19 = vector.shape_cast %18 : vector<32x64xf32> to vector<4x8x64xf32>
    %20 = vector.extract_strided_slice %19 {offsets = [0, 0, 0], sizes = [4, 8, 32], strides = [1, 1, 1]} : vector<4x8x64xf32> to vector<4x8x32xf32>
    %21 = vector.extract_strided_slice %19 {offsets = [0, 0, 32], sizes = [4, 8, 32], strides = [1, 1, 1]} : vector<4x8x64xf32> to vector<4x8x32xf32>
    %22 = arith.truncf %10 : vector<4x8x32xf32> to vector<4x8x32xbf16>
    %23 = arith.truncf %20 : vector<4x8x32xf32> to vector<4x8x32xbf16>
    "tpu.trace_start"() <{level = 10 : i32, message = "bqd,bkd->bqk"}> : () -> ()
    %cst_14 = arith.constant dense<0.000000e+00> : vector<4x8x8xf32>
    %24 = tpu.matmul %22, %23, %cst_14 {dimension_numbers = #tpu.dot_dimension_numbers<[2], [2], [1], [1], [0, 0, 0, 1, 1, 1], [0], [0]>} : vector<4x8x32xbf16>, vector<4x8x32xbf16>, vector<4x8x8xf32> -> vector<4x8x8xf32>
    "tpu.trace_stop"() : () -> ()
    %cst_15 = arith.constant 0.176776692 : f32
    %25 = vector.broadcast %cst_15 : f32 to vector<4x8x8xf32>
    %26 = arith.mulf %24, %25 : vector<4x8x8xf32>
    %cst_16 = arith.constant dense<0xFF800000> : vector<4x8xf32>
    %27 = vector.multi_reduction <maximumf>, %26, %cst_16 [2] : vector<4x8x8xf32> to vector<4x8xf32>
    %28 = vector.shape_cast %27 : vector<4x8xf32> to vector<4x8x1xf32>
    %29 = vector.broadcast %28 : vector<4x8x1xf32> to vector<4x8x8xf32>
    %30 = arith.subf %26, %29 : vector<4x8x8xf32>
    %31 = math.exp %30 : vector<4x8x8xf32>
    %cst_17 = arith.constant dense<0.000000e+00> : vector<4x8xf32>
    %32 = vector.multi_reduction <add>, %31, %cst_17 [2] : vector<4x8x8xf32> to vector<4x8xf32>
    %33 = vector.shape_cast %32 : vector<4x8xf32> to vector<4x8x1xf32>
    %34 = tpu.reciprocal %33 {approx = true} : vector<4x8x1xf32> -> vector<4x8x1xf32>
    %35 = vector.broadcast %34 : vector<4x8x1xf32> to vector<4x8x8xf32>
    %36 = arith.mulf %31, %35 : vector<4x8x8xf32>
    %37 = arith.truncf %21 : vector<4x8x32xf32> to vector<4x8x32xbf16>
    %38 = arith.truncf %36 : vector<4x8x8xf32> to vector<4x8x8xbf16>
    "tpu.trace_start"() <{level = 10 : i32, message = "bqk,bkd->bqd"}> : () -> ()
    %cst_18 = arith.constant dense<0.000000e+00> : vector<4x8x32xf32>
    %39 = tpu.matmul %38, %37, %cst_18 {dimension_numbers = #tpu.dot_dimension_numbers<[2], [1], [1], [2], [0, 0, 0, 1, 1, 2], [0], [0]>} : vector<4x8x8xbf16>, vector<4x8x32xbf16>, vector<4x8x32xf32> -> vector<4x8x32xf32>
    "tpu.trace_stop"() : () -> ()
    %40 = vector.shape_cast %39 : vector<4x8x32xf32> to vector<32x32xf32>
    %41 = arith.truncf %40 : vector<32x32xf32> to vector<32x32xbf16>
    %c0_19 = arith.constant 0 : index
    %c0_20 = arith.constant 0 : index
    %42 = vector.load %arg7[%c0_19, %c0_20] : memref<32x128xbf16, #tpu.memory_space<vmem>>, vector<32x128xbf16>
    %cst_21 = arith.constant dense<0.000000e+00> : vector<32x128xf32>
    %43 = tpu.matmul %41, %42, %cst_21 {dimension_numbers = #tpu.dot_dimension_numbers<[1], [0], [0], [1], [0, 0, 1, 1], [], []>} : vector<32x32xbf16>, vector<32x128xbf16>, vector<32x128xf32> -> vector<32x128xf32>
    %c0_22 = arith.constant 0 : index
    %c0_23 = arith.constant 0 : index
    %44 = vector.load %arg8[%c0_22, %c0_23] : memref<1x128xf32, #tpu.memory_space<vmem>>, vector<1x128xf32>
    %45 = vector.shape_cast %44 : vector<1x128xf32> to vector<128xf32>
    %46 = vector.shape_cast %45 : vector<128xf32> to vector<1x128xf32>
    %47 = vector.broadcast %46 : vector<1x128xf32> to vector<32x128xf32>
    %48 = arith.addf %43, %47 : vector<32x128xf32>
    %cst_24 = arith.constant dense<0xFF800000> : vector<32xf32>
    %49 = vector.multi_reduction <maximumf>, %48, %cst_24 [1] : vector<32x128xf32> to vector<32xf32>
    %50 = vector.shape_cast %49 : vector<32xf32> to vector<32x1xf32>
    %51 = vector.broadcast %50 : vector<32x1xf32> to vector<32x128xf32>
    %52 = arith.subf %48, %51 : vector<32x128xf32>
    %53 = math.exp %52 : vector<32x128xf32>
    %cst_25 = arith.constant dense<0.000000e+00> : vector<32xf32>
    %54 = vector.multi_reduction <add>, %53, %cst_25 [1] : vector<32x128xf32> to vector<32xf32>
    %55 = vector.shape_cast %54 : vector<32xf32> to vector<32x1xf32>
    %56 = tpu.reciprocal %55 {approx = true} : vector<32x1xf32> -> vector<32x1xf32>
    %57 = vector.broadcast %56 : vector<32x1xf32> to vector<32x128xf32>
    %58 = arith.mulf %53, %57 : vector<32x128xf32>
    %59 = vector.shape_cast %58 : vector<32x128xf32> to vector<4x8x128xf32>
    %c0_26 = arith.constant 0 : index
    %c0_27 = arith.constant 0 : index
    %c0_28 = arith.constant 0 : index
    %60 = vector.load %arg9[%c0_26, %c0_27, %c0_28] : memref<4x8x128xf32, #tpu.memory_space<vmem>>, vector<4x8x128xf32>
    tpu.vector_store %arg9[%c0_26, %c0_27, %c0_28], %59 {strides = array<i32>} : memref<4x8x128xf32, #tpu.memory_space<vmem>>, vector<4x8x128xf32>,
    return
  }
  func.func @transform_0(%arg0: i32) -> (i32, i32, i32) {
    %c0_i32 = arith.constant 0 : i32
    %c0_i32_0 = arith.constant 0 : i32
    %c0_i32_1 = arith.constant 0 : i32
    return %arg0, %c0_i32, %c0_i32_0 : i32, i32, i32
  }
  func.func @transform_1(%arg0: i32) -> (i32, i32, i32) {
    %c0_i32 = arith.constant 0 : i32
    %c0_i32_0 = arith.constant 0 : i32
    %c0_i32_1 = arith.constant 0 : i32
    return %arg0, %c0_i32, %c0_i32_0 : i32, i32, i32
  }
  func.func @transform_2(%arg0: i32) -> (i32, i32) {
    %c0_i32 = arith.constant 0 : i32
    %c0_i32_0 = arith.constant 0 : i32
    %c0_i32_1 = arith.constant 0 : i32
    return %c0_i32, %c0_i32_0 : i32, i32
  }
  func.func @transform_3(%arg0: i32) -> (i32, i32) {
    %c0_i32 = arith.constant 0 : i32
    %c0_i32_0 = arith.constant 0 : i32
    %c0_i32_1 = arith.constant 0 : i32
    return %c0_i32, %c0_i32_0 : i32, i32
  }
  func.func @transform_4(%arg0: i32) -> (i32, i32) {
    %c0_i32 = arith.constant 0 : i32
    %c0_i32_0 = arith.constant 0 : i32
    %c0_i32_1 = arith.constant 0 : i32
    return %c0_i32, %c0_i32_0 : i32, i32
  }
  func.func @transform_5(%arg0: i32) -> (i32, i32) {
    %c0_i32 = arith.constant 0 : i32
    %c0_i32_0 = arith.constant 0 : i32
    %c0_i32_1 = arith.constant 0 : i32
    return %c0_i32, %c0_i32_0 : i32, i32
  }
  func.func @transform_6(%arg0: i32) -> (i32, i32) {
    %c0_i32 = arith.constant 0 : i32
    %c0_i32_0 = arith.constant 0 : i32
    %c0_i32_1 = arith.constant 0 : i32
    return %c0_i32, %c0_i32_0 : i32, i32
  }
  func.func @transform_7(%arg0: i32) -> (i32, i32) {
    %c0_i32 = arith.constant 0 : i32
    %c0_i32_0 = arith.constant 0 : i32
    %c0_i32_1 = arith.constant 0 : i32
    return %c0_i32, %c0_i32_0 : i32, i32
  }
  func.func @transform_8(%arg0: i32) -> (i32, i32, i32) {
    %c0_i32 = arith.constant 0 : i32
    %c0_i32_0 = arith.constant 0 : i32
    %c0_i32_1 = arith.constant 0 : i32
    return %arg0, %c0_i32, %c0_i32_0 : i32, i32, i32
  }
}

</mosaic_0001>

<llo_original>
// kernel: tpu_custom_call.1
$region0: #{tpu_custom_call.1}
  #allocation0 [shape = 'u32[]', space=smem, size = 0x4, offset = 0x4, fixed_abs, tag = 'smem constant byte address 0x4 - core index']
  #allocation1 [shape = 'u32[144,128]{1,0:T(1,128)}', space=vmem, size = 0x12000, scoped, tag = 'internal scratch']
  %s0 = inlined_call_operand.hbm [shape: bf16[8,8,32], index: 0, kind: input, shape index: {}]
  %s1 = inlined_call_operand.hbm [shape: bf16[8,8,32], index: 1, kind: input, shape index: {}]
  %s2 = inlined_call_operand.hbm [shape: bf16[32,32], index: 2, kind: input, shape index: {}]
  %s3 = inlined_call_operand.vmem [shape: f32[1,32], index: 3, kind: input, shape index: {}]
  %s4 = inlined_call_operand.hbm [shape: bf16[32,64], index: 4, kind: input, shape index: {}]
  %s5 = inlined_call_operand.vmem [shape: f32[1,64], index: 5, kind: input, shape index: {}]
  %s6 = inlined_call_operand.hbm [shape: bf16[32,128], index: 6, kind: input, shape index: {}]
  %s7 = inlined_call_operand.vmem [shape: f32[1,128], index: 7, kind: input, shape index: {}]
  %s8 = inlined_call_operand.hbm [shape: f32[8,8,128], index: 8, kind: output, shape index: {}]
  %s9 = sld [smem:[#allocation0]]
  $region85: #{tpu_custom_call.1} parent=0
    _
  %s11 = ssub.s32 1, %s9
  %s12 = scalar_select 0, %s11, %s9
  $region1: #{tpu_custom_call.1} parent=0
    #allocation2 [shape = 'u8[16384]{0}', space=vmem, size = 0x4000, scoped, tag = 'input window, operand 0']
    #allocation3 [shape = 's32[2]{0}', space=sflag, size = 0x8, scoped, tag = 'scoped memory for tpu_custom_call.1']
    #allocation4 [shape = 's32[2]{0}', space=sflag, size = 0x8, scoped, tag = 'scoped memory for tpu_custom_call.1']
    #allocation5 [shape = 'u8[16384]{0}', space=vmem, size = 0x4000, scoped, tag = 'input window, operand 1']
    #allocation6 [shape = 's32[2]{0}', space=sflag, size = 0x8, scoped, tag = 'scoped memory for tpu_custom_call.1']
    #allocation7 [shape = 'u8[8192]{0}', space=vmem, size = 0x2000, scoped, tag = 'input window, operand 2, single buffered']
    #allocation8 [shape = 'u8[8192]{0}', space=vmem, size = 0x2000, scoped, tag = 'input window, operand 4, single buffered']
    #allocation9 [shape = 's32[1]{0}', space=sflag, size = 0x4, scoped, tag = 'scoped memory for tpu_custom_call.1']
    #allocation10 [shape = 'u8[8192]{0}', space=vmem, size = 0x2000, scoped, tag = 'input window, operand 6, single buffered']
    #allocation11 [shape = 'u8[32768]{0}', space=vmem, size = 0x8000, scoped, tag = 'output window, operand 0']
    %13 = vsyncpa [#allocation3], 0
    %s14 = scalar_lea.sflag [#allocation3], 1
    %15 = vsyncpa %s14, 0
    %16 = vsyncpa [#allocation6], 0
    %s17 = scalar_lea.sflag [#allocation6], 1
    %18 = vsyncpa %s17, 0
    %19 = vsyncpa [#allocation9], 0
    %20 = vsyncpa [#allocation4], 0
    %s21 = scalar_lea.sflag [#allocation4], 1
    %22 = vsyncpa %s21, 0
    loop: start=0, step=1, limit=4
    $region2: #{tpu_custom_call.1} parent=1 // loop_pre_header
      _
    $region3: #{tpu_custom_call.1} parent=1 // loop_header
      %s24 = sphi 0, %s28
      %p25 = scmp.ge.s32.totalorder %s24, 4
      %s34 = sphi 0, %s36
      %s37 = sphi 0, %s34
      %s38 = sphi 0, %s37
      %s54 = sphi 0, %s38
      %s60 = sphi 0, %s62
      %s63 = sphi 0, %s60
      %s64 = sphi 0, %s63
      %s80 = sphi 0, %s64
      %s84 = sphi 0, %s84
      %s86 = sphi 0, %s84
      %s87 = sphi 0, %s86
      %s101 = sphi 0, %s87
      %s105 = sphi 0, %s105
      %s107 = sphi 0, %s105
      %s108 = sphi 0, %s107
      %s122 = sphi 0, %s108
      %s126 = sphi 0, %s126
      %s128 = sphi 0, %s126
      %s129 = sphi 0, %s128
      %s143 = sphi 0, %s129
      %s147 = sphi 0, %s147
      %s149 = sphi 0, %s147
      %s150 = sphi 0, %s149
      %s164 = sphi 0, %s150
      %s168 = sphi 0, %s168
      %s170 = sphi 0, %s168
      %s171 = sphi 0, %s170
      %s185 = sphi 0, %s171
      %s189 = sphi 0, %s189
      %s191 = sphi 0, %s189
      %s192 = sphi 0, %s191
      %s206 = sphi 0, %s192
      %s212 = sphi 0, %s214
      %s215 = sphi 0, %s212
      %s216 = sphi 0, %s215
      %s232 = sphi 0, %s216
    $region4: #{tpu_custom_call.1} parent=1 // loop_header_branch
      %27 = sbr.rel (%p25) target = $region8
    $region5: #{tpu_custom_call.1} parent=1 // loop_body
      %s29 = ssub.s32 %s24, 1
      %s30 = ssub.s32 %s24, 2
      %s31 = sadd.s32 %s24, 1
      %s32 = ssub.s32 %s24, %s31
      %p33 = scmp.eq.s32.totalorder %s32, 0
      %s35 = sadd.s32 %s34, 1
      %s36 = scalar_select %p33, %s34, %s35
      %p39 = pneg %p33
      %p40 = scmp.eq.s32.totalorder %s24, 1
      %p41 = por %p39, %p40
      %p42 = scmp.ne.s32.totalorder %s34, %s37
      %p43 = scmp.eq.s32.totalorder %s24, 0
      %p44 = por %p42, %p43
      %p45 = scmp.ne.s32.totalorder %s34, %s37
      %p46 = scmp.eq.s32.totalorder %s29, 1
      %p47 = por %p45, %p46
      %p48 = scmp.ne.s32.totalorder %s37, %s38
      %p49 = scmp.eq.s32.totalorder %s29, 0
      %p50 = por %p48, %p49
      %p51 = scmp.ne.s32.totalorder %s37, %s38
      %p52 = scmp.eq.s32.totalorder %s30, 1
      %p53 = por %p51, %p52
      %p55 = scmp.ne.s32.totalorder %s38, %s54
      %p56 = scmp.eq.s32.totalorder %s30, 0
      %p57 = por %p55, %p56
      %s58 = ssub.s32 %s24, %s31
      %p59 = scmp.eq.s32.totalorder %s58, 0
      %s61 = sadd.s32 %s60, 1
      %s62 = scalar_select %p59, %s60, %s61
      %p65 = pneg %p59
      %p66 = scmp.eq.s32.totalorder %s24, 1
      %p67 = por %p65, %p66
      %p68 = scmp.ne.s32.totalorder %s60, %s63
      %p69 = scmp.eq.s32.totalorder %s24, 0
      %p70 = por %p68, %p69
      %p71 = scmp.ne.s32.totalorder %s60, %s63
      %p72 = scmp.eq.s32.totalorder %s29, 1
      %p73 = por %p71, %p72
      %p74 = scmp.ne.s32.totalorder %s63, %s64
      %p75 = scmp.eq.s32.totalorder %s29, 0
      %p76 = por %p74, %p75
      %p77 = scmp.ne.s32.totalorder %s63, %s64
      %p78 = scmp.eq.s32.totalorder %s30, 1
      %p79 = por %p77, %p78
      %p81 = scmp.ne.s32.totalorder %s64, %s80
      %p82 = scmp.eq.s32.totalorder %s30, 0
      %p83 = por %p81, %p82
      %s85 = sadd.s32 %s84, 1
      %p88 = scmp.eq.s32.totalorder %s24, 1
      %p89 = scmp.ne.s32.totalorder %s84, %s86
      %p90 = scmp.eq.s32.totalorder %s24, 0
      %p91 = por %p89, %p90
      %p92 = scmp.ne.s32.totalorder %s84, %s86
      %p93 = scmp.eq.s32.totalorder %s29, 1
      %p94 = por %p92, %p93
      %p95 = scmp.ne.s32.totalorder %s86, %s87
      %p96 = scmp.eq.s32.totalorder %s29, 0
      %p97 = por %p95, %p96
      %p98 = scmp.ne.s32.totalorder %s86, %s87
      %p99 = scmp.eq.s32.totalorder %s30, 1
      %p100 = por %p98, %p99
      %p102 = scmp.ne.s32.totalorder %s87, %s101
      %p103 = scmp.eq.s32.totalorder %s30, 0
      %p104 = por %p102, %p103
      %s106 = sadd.s32 %s105, 1
      %p109 = scmp.eq.s32.totalorder %s24, 1
      %p110 = scmp.ne.s32.totalorder %s105, %s107
      %p111 = scmp.eq.s32.totalorder %s24, 0
      %p112 = por %p110, %p111
      %p113 = scmp.ne.s32.totalorder %s105, %s107
      %p114 = scmp.eq.s32.totalorder %s29, 1
      %p115 = por %p113, %p114
      %p116 = scmp.ne.s32.totalorder %s107, %s108
      %p117 = scmp.eq.s32.totalorder %s29, 0
      %p118 = por %p116, %p117
      %p119 = scmp.ne.s32.totalorder %s107, %s108
      %p120 = scmp.eq.s32.totalorder %s30, 1
      %p121 = por %p119, %p120
      %p123 = scmp.ne.s32.totalorder %s108, %s122
      %p124 = scmp.eq.s32.totalorder %s30, 0
      %p125 = por %p123, %p124
      %s127 = sadd.s32 %s126, 1
      %p130 = scmp.eq.s32.totalorder %s24, 1
      %p131 = scmp.ne.s32.totalorder %s126, %s128
      %p132 = scmp.eq.s32.totalorder %s24, 0
      %p133 = por %p131, %p132
      %p134 = scmp.ne.s32.totalorder %s126, %s128
      %p135 = scmp.eq.s32.totalorder %s29, 1
      %p136 = por %p134, %p135
      %p137 = scmp.ne.s32.totalorder %s128, %s129
      %p138 = scmp.eq.s32.totalorder %s29, 0
      %p139 = por %p137, %p138
      %p140 = scmp.ne.s32.totalorder %s128, %s129
      %p141 = scmp.eq.s32.totalorder %s30, 1
      %p142 = por %p140, %p141
      %p144 = scmp.ne.s32.totalorder %s129, %s143
      %p145 = scmp.eq.s32.totalorder %s30, 0
      %p146 = por %p144, %p145
      %s148 = sadd.s32 %s147, 1
      %p151 = scmp.eq.s32.totalorder %s24, 1
      %p152 = scmp.ne.s32.totalorder %s147, %s149
      %p153 = scmp.eq.s32.totalorder %s24, 0
      %p154 = por %p152, %p153
      %p155 = scmp.ne.s32.totalorder %s147, %s149
      %p156 = scmp.eq.s32.totalorder %s29, 1
      %p157 = por %p155, %p156
      %p158 = scmp.ne.s32.totalorder %s149, %s150
      %p159 = scmp.eq.s32.totalorder %s29, 0
      %p160 = por %p158, %p159
      %p161 = scmp.ne.s32.totalorder %s149, %s150
      %p162 = scmp.eq.s32.totalorder %s30, 1
      %p163 = por %p161, %p162
      %p165 = scmp.ne.s32.totalorder %s150, %s164
      %p166 = scmp.eq.s32.totalorder %s30, 0
      %p167 = por %p165, %p166
      %s169 = sadd.s32 %s168, 1
      %p172 = scmp.eq.s32.totalorder %s24, 1
      %p173 = scmp.ne.s32.totalorder %s168, %s170
      %p174 = scmp.eq.s32.totalorder %s24, 0
      %p175 = por %p173, %p174
      %p176 = scmp.ne.s32.totalorder %s168, %s170
      %p177 = scmp.eq.s32.totalorder %s29, 1
      %p178 = por %p176, %p177
      %p179 = scmp.ne.s32.totalorder %s170, %s171
      %p180 = scmp.eq.s32.totalorder %s29, 0
      %p181 = por %p179, %p180
      %p182 = scmp.ne.s32.totalorder %s170, %s171
      %p183 = scmp.eq.s32.totalorder %s30, 1
      %p184 = por %p182, %p183
      %p186 = scmp.ne.s32.totalorder %s171, %s185
      %p187 = scmp.eq.s32.totalorder %s30, 0
      %p188 = por %p186, %p187
      %s190 = sadd.s32 %s189, 1
      %p193 = scmp.eq.s32.totalorder %s24, 1
      %p194 = scmp.ne.s32.totalorder %s189, %s191
      %p195 = scmp.eq.s32.totalorder %s24, 0
      %p196 = por %p194, %p195
      %p197 = scmp.ne.s32.totalorder %s189, %s191
      %p198 = scmp.eq.s32.totalorder %s29, 1
      %p199 = por %p197, %p198
      %p200 = scmp.ne.s32.totalorder %s191, %s192
      %p201 = scmp.eq.s32.totalorder %s29, 0
      %p202 = por %p200, %p201
      %p203 = scmp.ne.s32.totalorder %s191, %s192
      %p204 = scmp.eq.s32.totalorder %s30, 1
      %p205 = por %p203, %p204
      %p207 = scmp.ne.s32.totalorder %s192, %s206
      %p208 = scmp.eq.s32.totalorder %s30, 0
      %p209 = por %p207, %p208
      %s210 = ssub.s32 %s24, %s31
      %p211 = scmp.eq.s32.totalorder %s210, 0
      %s213 = sadd.s32 %s212, 1
      %s214 = scalar_select %p211, %s212, %s213
      %p217 = pneg %p211
      %p218 = scmp.eq.s32.totalorder %s24, 1
      %p219 = por %p217, %p218
      %p220 = scmp.ne.s32.totalorder %s212, %s215
      %p221 = scmp.eq.s32.totalorder %s24, 0
      %p222 = por %p220, %p221
      %p223 = scmp.ne.s32.totalorder %s212, %s215
      %p224 = scmp.eq.s32.totalorder %s29, 1
      %p225 = por %p223, %p224
      %p226 = scmp.ne.s32.totalorder %s215, %s216
      %p227 = scmp.eq.s32.totalorder %s29, 0
      %p228 = por %p226, %p227
      %p229 = scmp.ne.s32.totalorder %s215, %s216
      %p230 = scmp.eq.s32.totalorder %s30, 1
      %p231 = por %p229, %p230
      %p233 = scmp.ne.s32.totalorder %s216, %s232
      %p234 = scmp.eq.s32.totalorder %s30, 0
      %p235 = por %p233, %p234
      %p236 = scmp.le.s32.totalorder 1, %s24
      %p237 = scmp.lt.s32.totalorder %s24, 3
      %p238 = pnand %p236, %p237
      %p239 = pneg %p238
      // Predicated region
      $region9: #{tpu_custom_call.1} parent=5 // pred_check
        _
      $region10: #{tpu_custom_call.1} parent=5 // pred_check_branch
        %241 = sbr.rel (%p238) target = $region12
      $region11: #{tpu_custom_call.1} parent=5 // pred_region
        %s242 = ssub.s32 %s24, 1
        // Predicated region
        $region13: #{tpu_custom_call.1} parent=11 // pred_check
          %p243 = pneg %p97
        $region14: #{tpu_custom_call.1} parent=11 // pred_check_branch
          %245 = sbr.rel (%p243) target = $region16
        $region15: #{tpu_custom_call.1} parent=11 // pred_region
          %s247 = ssub.s32 256, 256
          %248 = vsyncadd [#allocation6], %s247
          %s249 = sshll.u32 [#allocation7], 4
          %s250 = int_to_ptr.vmem [resolvable:$true] %s249
          %255 = dma.hbm_to_vmem [thread:$0]  %s2, 256, %s250, [#allocation6], 64, 64, 4
        $region16: #{tpu_custom_call.1} parent=11 // pred_fallthru
          _
        // Predicated region
        $region17: #{tpu_custom_call.1} parent=11 // pred_check
          %p256 = pneg %p118
        $region18: #{tpu_custom_call.1} parent=11 // pred_check_branch
          %258 = sbr.rel (%p256) target = $region20
        $region19: #{tpu_custom_call.1} parent=11 // pred_region
          _
        $region20: #{tpu_custom_call.1} parent=11 // pred_fallthru
          _
        // Predicated region
        $region21: #{tpu_custom_call.1} parent=11 // pred_check
          %p259 = pneg %p139
        $region22: #{tpu_custom_call.1} parent=11 // pred_check_branch
          %261 = sbr.rel (%p259) target = $region24
        $region23: #{tpu_custom_call.1} parent=11 // pred_region
          %s263 = ssub.s32 256, 256
          %264 = vsyncadd [#allocation9], %s263
          %s265 = sshll.u32 [#allocation8], 4
          %s266 = int_to_ptr.vmem [resolvable:$true] %s265
          %271 = dma.hbm_to_vmem [thread:$0]  %s4, 256, %s266, [#allocation9], 64, 64, 4
        $region24: #{tpu_custom_call.1} parent=11 // pred_fallthru
          _
        // Predicated region
        $region25: #{tpu_custom_call.1} parent=11 // pred_check
          %p272 = pneg %p160
        $region26: #{tpu_custom_call.1} parent=11 // pred_check_branch
          %274 = sbr.rel (%p272) target = $region28
        $region27: #{tpu_custom_call.1} parent=11 // pred_region
          _
        $region28: #{tpu_custom_call.1} parent=11 // pred_fallthru
          _
        // Predicated region
        $region29: #{tpu_custom_call.1} parent=11 // pred_check
          %p275 = pneg %p181
        $region30: #{tpu_custom_call.1} parent=11 // pred_check_branch
          %277 = sbr.rel (%p275) target = $region32
        $region31: #{tpu_custom_call.1} parent=11 // pred_region
          %s279 = ssub.s32 256, 256
          %280 = vsyncadd [#allocation9], %s279
          %s281 = sshll.u32 [#allocation10], 4
          %s282 = int_to_ptr.vmem [resolvable:$true] %s281
          %287 = dma.hbm_to_vmem [thread:$0]  %s6, 256, %s282, [#allocation9], 64, 64, 4
        $region32: #{tpu_custom_call.1} parent=11 // pred_fallthru
          _
        // Predicated region
        $region33: #{tpu_custom_call.1} parent=11 // pred_check
          %p288 = pneg %p202
        $region34: #{tpu_custom_call.1} parent=11 // pred_check_branch
          %290 = sbr.rel (%p288) target = $region36
        $region35: #{tpu_custom_call.1} parent=11 // pred_region
          _
        $region36: #{tpu_custom_call.1} parent=11 // pred_fallthru
          _
      $region12: #{tpu_custom_call.1} parent=5 // pred_fallthru
        _
      %p291 = scmp.lt.s32.totalorder %s24, 2
      // Predicated region
      $region37: #{tpu_custom_call.1} parent=5 // pred_check
        %p292 = pneg %p291
      $region38: #{tpu_custom_call.1} parent=5 // pred_check_branch
        %294 = sbr.rel (%p292) target = $region40
      $region39: #{tpu_custom_call.1} parent=5 // pred_region
        // Predicated region
        $region41: #{tpu_custom_call.1} parent=39 // pred_check
          %p295 = pneg %p44
        $region42: #{tpu_custom_call.1} parent=39 // pred_check_branch
          %297 = sbr.rel (%p295) target = $region44
        $region43: #{tpu_custom_call.1} parent=39 // pred_region
          %s298 = sand.u32 %s34, 1
          %s299 = scalar_lea.sflag [#allocation3], %s298
          %s300 = sand.u32 %s34, 1
          %s301 = smul.addr %s300, 16
          %s302 = scalar_lea.vmem [#allocation2], %s301
          %s303 = smul.u32 4, %s24
          %s305 = ssub.s32 256, 256
          %306 = vsyncadd %s299, %s305
          %s307 = smul.addr %s303, 64
          %s308 = scalar_lea.hbm %s0, %s307
          %s309 = sshll.u32 %s302, 4
          %s310 = int_to_ptr.vmem [resolvable:$true] %s309
          %315 = dma.hbm_to_vmem [thread:$0]  %s308, 256, %s310, %s299, 64, 64, 4
        $region44: #{tpu_custom_call.1} parent=39 // pred_fallthru
          _
        // Predicated region
        $region45: #{tpu_custom_call.1} parent=39 // pred_check
          %p316 = pneg %p70
        $region46: #{tpu_custom_call.1} parent=39 // pred_check_branch
          %318 = sbr.rel (%p316) target = $region48
        $region47: #{tpu_custom_call.1} parent=39 // pred_region
          %s319 = sand.u32 %s24, 1
          %s320 = scalar_lea.sflag [#allocation6], %s319
          %s321 = sand.u32 %s60, 1
          %s322 = smul.addr %s321, 16
          %s323 = scalar_lea.vmem [#allocation5], %s322
          %s324 = smul.u32 4, %s24
          %s326 = ssub.s32 256, 256
          %327 = vsyncadd %s320, %s326
          %s328 = smul.addr %s324, 64
          %s329 = scalar_lea.hbm %s1, %s328
          %s330 = sshll.u32 %s323, 4
          %s331 = int_to_ptr.vmem [resolvable:$true] %s330
          %336 = dma.hbm_to_vmem [thread:$0]  %s329, 256, %s331, %s320, 64, 64, 4
        $region48: #{tpu_custom_call.1} parent=39 // pred_fallthru
          _
      $region40: #{tpu_custom_call.1} parent=5 // pred_fallthru
        _
      %p337 = scmp.le.s32.totalorder 1, %s24
      %p338 = scmp.lt.s32.totalorder %s24, 3
      %p339 = pnand %p337, %p338
      %p340 = pneg %p339
      // Predicated region
      $region49: #{tpu_custom_call.1} parent=5 // pred_check
        _
      $region50: #{tpu_custom_call.1} parent=5 // pred_check_branch
        %342 = sbr.rel (%p339) target = $region52
      $region51: #{tpu_custom_call.1} parent=5 // pred_region
        %s343 = ssub.s32 %s24, 1
        %s344 = sand.u32 %s37, 1
        %s345 = scalar_lea.sflag [#allocation3], %s344
        %s346 = sand.u32 %s37, 1
        %s347 = smul.addr %s346, 16
        %s348 = scalar_lea.vmem [#allocation2], %s347
        // Predicated region
        $region53: #{tpu_custom_call.1} parent=51 // pred_check
          %p349 = pneg %p50
        $region54: #{tpu_custom_call.1} parent=51 // pred_check_branch
          %351 = sbr.rel (%p349) target = $region56
        $region55: #{tpu_custom_call.1} parent=51 // pred_region
          %352 = dma.done %s345, 256
        $region56: #{tpu_custom_call.1} parent=51 // pred_fallthru
          _
        %s353 = sand.u32 %s29, 1
        %s354 = scalar_lea.sflag [#allocation6], %s353
        %s355 = sand.u32 %s63, 1
        %s356 = smul.addr %s355, 16
        %s357 = scalar_lea.vmem [#allocation5], %s356
        // Predicated region
        $region57: #{tpu_custom_call.1} parent=51 // pred_check
          %p358 = pneg %p76
        $region58: #{tpu_custom_call.1} parent=51 // pred_check_branch
          %360 = sbr.rel (%p358) target = $region60
        $region59: #{tpu_custom_call.1} parent=51 // pred_region
          %361 = dma.done %s354, 256
        $region60: #{tpu_custom_call.1} parent=51 // pred_fallthru
          _
        // Predicated region
        $region61: #{tpu_custom_call.1} parent=51 // pred_check
          %p362 = pneg %p97
        $region62: #{tpu_custom_call.1} parent=51 // pred_check_branch
          %364 = sbr.rel (%p362) target = $region64
        $region63: #{tpu_custom_call.1} parent=51 // pred_region
          %365 = dma.done [#allocation6], 256
        $region64: #{tpu_custom_call.1} parent=51 // pred_fallthru
          _
        // Predicated region
        $region65: #{tpu_custom_call.1} parent=51 // pred_check
          %p366 = pneg %p139
        $region66: #{tpu_custom_call.1} parent=51 // pred_check_branch
          %368 = sbr.rel (%p366) target = $region68
        $region67: #{tpu_custom_call.1} parent=51 // pred_region
          %369 = dma.done [#allocation9], 256
        $region68: #{tpu_custom_call.1} parent=51 // pred_fallthru
          _
        // Predicated region
        $region69: #{tpu_custom_call.1} parent=51 // pred_check
          %p370 = pneg %p181
        $region70: #{tpu_custom_call.1} parent=51 // pred_check_branch
          %372 = sbr.rel (%p370) target = $region72
        $region71: #{tpu_custom_call.1} parent=51 // pred_region
          %373 = dma.done [#allocation9], 256
        $region72: #{tpu_custom_call.1} parent=51 // pred_fallthru
          _
        %s374 = sand.u32 %s37, 1
        %s375 = scalar_lea.sflag [#allocation3], %s374
        %s376 = sand.u32 %s37, 1
        %s377 = smul.addr %s376, 16
        %s378 = scalar_lea.vmem [#allocation2], %s377
        %p379 = pneg %p50
        %p380 = pneg %p47
        %s381 = sand.u32 %s29, 1
        %s382 = scalar_lea.sflag [#allocation6], %s381
        %s383 = sand.u32 %s63, 1
        %s384 = smul.addr %s383, 16
        %s385 = scalar_lea.vmem [#allocation5], %s384
        %p386 = pneg %p76
        %p387 = pneg %p73
        %p388 = pneg %p97
        %p389 = pneg %p94
        %p390 = pneg %p118
        %p391 = pneg %p115
        %p392 = pneg %p139
        %p393 = pneg %p136
        %p394 = pneg %p160
        %p395 = pneg %p157
        %p396 = pneg %p181
        %p397 = pneg %p178
        %p398 = pneg %p202
        %p399 = pneg %p199
        %p400 = pneg %p228
        %p401 = pneg %p225
        %s402 = sand.u32 %s215, 1
        %s403 = scalar_lea.sflag [#allocation4], %s402
        %s404 = sand.u32 %s215, 1
        %s405 = smul.addr %s404, 32
        %s406 = scalar_lea.vmem [#allocation11], %s405
        %s407 = smul.u32 4, %s29
        %s408 = smul.u32 4, %s29
        %s409 = smul.u32 4, %s29
        %v411 = vld [vmem:[%s348] sm:$0xf]
        %v412 = vld [vmem:[%s348 + $0x4] sm:$0xf]
        %v413 = vld [vmem:[%s348 + $0x8] sm:$0xf]
        %v414 = vld [vmem:[%s348 + $0xc] sm:$0xf]
        %v415 = vld [vmem:[%s357] sm:$0xf]
        %v416 = vld [vmem:[%s357 + $0x4] sm:$0xf]
        %v417 = vld [vmem:[%s357 + $0x8] sm:$0xf]
        %v418 = vld [vmem:[%s357 + $0xc] sm:$0xf]
        %v419 = vld [vmem:[#allocation7] sm:$0xf]
        %v420 = vld [vmem:[#allocation7 + $0x4] sm:$0xf]
        %v421 = vld [vmem:[#allocation7 + $0x8] sm:$0xf]
        %v422 = vld [vmem:[#allocation7 + $0xc] sm:$0xf]
        %v423 = vld [vmem:[%s3] sm:$0x1]
        %v425 = vlaneseq
        %v426 = vshrl.u32 %v425, 7
        %v427 = vsub.s32 0, %v426
        %v428 = vrot.slane %v423, %v427
        %v434 = vunpack.c.l.b16 %v411
        %v435 = vunpack.c.l.b16 %v412
        %v436 = vunpack.c.l.b16 %v413
        %v437 = vunpack.c.l.b16 %v414
        %v438 = vpack.c.b16 %v435, %v434
        %v439 = vpack.c.b16 %v437, %v436
        %v444 = vunpack.c.l.b16 %v419
        %v445 = vunpack.c.l.b16 %v420
        %v446 = vunpack.c.l.b16 %v421
        %v447 = vunpack.c.l.b16 %v422
        %v448 = vpack.c.b16 %v445, %v444
        %v449 = vpack.c.b16 %v447, %v446
        %vm452 = vcmask 261120
        %v454 = vsel %vm452, %v438, 0
        %v457 = vsel %vm452, %v439, 0
        %459 = vmatprep.subr.bf16.mxu0 0
        %460 = vmatpush1.bf16.msra.mxu0 0
        %461 = vmatprep.subr.bf16.mxu0 0
        %462 = vmatpush1.bf16.msra.mxu0 0
        %463 = vmatprep.subr.bf16.mxu0 0
        %464 = vmatpush1.bf16.msra.mxu0 0
        %465 = vmatprep.subr.bf16.mxu0 0
        %466 = vmatpush1.bf16.msra.mxu0 0
        %467 = vmatprep.subr.bf16.mxu0 0
        %468 = vmatpush1.bf16.msra.mxu0 0
        %469 = vmatprep.subr.bf16.mxu0 0
        %470 = vmatpush1.bf16.msra.mxu0 0
        %471 = vmatprep.subr.bf16.mxu0 0
        %472 = vmatpush1.bf16.msra.mxu0 %v449
        %473 = vmatprep.subr.bf16.mxu0 0
        %474 = vmatpush1.bf16.msra.mxu0 %v448
        %475 = vmatprep.subr.bf16.mxu0 0
        %476 = vmatpush2.bf16.msra.mxu0 0
        %477 = vmatprep.subr.bf16.mxu0 0
        %478 = vmatpush2.bf16.msra.mxu0 0
        %479 = vmatprep.subr.bf16.mxu0 0
        %480 = vmatpush2.bf16.msra.mxu0 0
        %481 = vmatprep.subr.bf16.mxu0 0
        %482 = vmatpush2.bf16.msra.mxu0 0
        %483 = vmatprep.subr.bf16.mxu0 0
        %484 = vmatpush2.bf16.msra.mxu0 0
        %485 = vmatprep.subr.bf16.mxu0 0
        %486 = vmatpush2.bf16.msra.mxu0 0
        %487 = vmatprep.subr.bf16.mxu0 0
        %488 = vmatpush2.bf16.msra.mxu0 0
        %489 = vmatprep.subr.bf16.mxu0 0
        %490 = vmatpush2.bf16.msra.mxu0 0
        %491 = vmatprep.mubr.bf16.mxu0 0
        %492 = vmatmul.mubr.bf16.gmra.mxu0 %v454
        %v493 = vpop.f32.mrf.mxu0
        %v494 = vadd.f32 %v428, %v493
        %v495 = vpop.f32.mrf.mxu0
        %v496 = vpop.f32.mrf.mxu0
        %v497 = vadd.f32 %v428, %v496
        %v498 = vpop.f32.mrf.mxu0
        %499 = vmatprep.mubr.bf16.mxu0 0
        %500 = vmatmul.mubr.bf16.gmra.mxu0 %v457
        %v501 = vpop.f32.mrf.mxu0
        %v502 = vadd.f32 %v428, %v501
        %v503 = vpop.f32.mrf.mxu0
        %v504 = vpop.f32.mrf.mxu0
        %v505 = vadd.f32 %v428, %v504
        %v506 = vpop.f32.mrf.mxu0
        %507 = vdwg.mxu0
        %v508 = vld [vmem:[#allocation8] sm:$0xf]
        %v509 = vld [vmem:[#allocation8 + $0x4] sm:$0xf]
        %v510 = vld [vmem:[#allocation8 + $0x8] sm:$0xf]
        %v511 = vld [vmem:[#allocation8 + $0xc] sm:$0xf]
        %v512 = vld [vmem:[%s5] sm:$0x1]
        %v514 = vlaneseq
        %v515 = vshrl.u32 %v514, 7
        %v516 = vsub.s32 0, %v515
        %v517 = vrot.slane %v512, %v516
        %v523 = vunpack.c.l.b16 %v415
        %v524 = vunpack.c.l.b16 %v416
        %v525 = vunpack.c.l.b16 %v417
        %v526 = vunpack.c.l.b16 %v418
        %v527 = vpack.c.b16 %v524, %v523
        %v528 = vpack.c.b16 %v526, %v525
        %v533 = vunpack.c.l.b16 %v508
        %v534 = vunpack.c.l.b16 %v509
        %v535 = vunpack.c.l.b16 %v510
        %v536 = vunpack.c.l.b16 %v511
        %v537 = vpack.c.b16 %v534, %v533
        %v538 = vpack.c.b16 %v536, %v535
        %v542 = vsel %vm452, %v527, 0
        %v545 = vsel %vm452, %v528, 0
        %547 = vmatprep.subr.bf16.mxu0 0
        %548 = vmatpush1.bf16.msra.mxu0 0
        %549 = vmatprep.subr.bf16.mxu0 0
        %550 = vmatpush1.bf16.msra.mxu0 0
        %551 = vmatprep.subr.bf16.mxu0 0
        %552 = vmatpush1.bf16.msra.mxu0 0
        %553 = vmatprep.subr.bf16.mxu0 0
        %554 = vmatpush1.bf16.msra.mxu0 0
        %555 = vmatprep.subr.bf16.mxu0 0
        %556 = vmatpush1.bf16.msra.mxu0 0
        %557 = vmatprep.subr.bf16.mxu0 0
        %558 = vmatpush1.bf16.msra.mxu0 0
        %559 = vmatprep.subr.bf16.mxu0 0
        %560 = vmatpush1.bf16.msra.mxu0 %v538
        %561 = vmatprep.subr.bf16.mxu0 0
        %562 = vmatpush1.bf16.msra.mxu0 %v537
        %563 = vmatprep.subr.bf16.mxu0 0
        %564 = vmatpush2.bf16.msra.mxu0 0
        %565 = vmatprep.subr.bf16.mxu0 0
        %566 = vmatpush2.bf16.msra.mxu0 0
        %567 = vmatprep.subr.bf16.mxu0 0
        %568 = vmatpush2.bf16.msra.mxu0 0
        %569 = vmatprep.subr.bf16.mxu0 0
        %570 = vmatpush2.bf16.msra.mxu0 0
        %571 = vmatprep.subr.bf16.mxu0 0
        %572 = vmatpush2.bf16.msra.mxu0 0
        %573 = vmatprep.subr.bf16.mxu0 0
        %574 = vmatpush2.bf16.msra.mxu0 0
        %575 = vmatprep.subr.bf16.mxu0 0
        %576 = vmatpush2.bf16.msra.mxu0 0
        %577 = vmatprep.subr.bf16.mxu0 0
        %578 = vmatpush2.bf16.msra.mxu0 0
        %579 = vmatprep.mubr.bf16.mxu0 0
        %580 = vmatmul.mubr.bf16.gmra.mxu0 %v542
        %v581 = vpop.f32.mrf.mxu0
        %v582 = vadd.f32 %v517, %v581
        %v583 = vpop.f32.mrf.mxu0
        %v584 = vpop.f32.mrf.mxu0
        %v585 = vadd.f32 %v517, %v584
        %v586 = vpop.f32.mrf.mxu0
        %587 = vmatprep.mubr.bf16.mxu0 0
        %588 = vmatmul.mubr.bf16.gmra.mxu0 %v545
        %v589 = vpop.f32.mrf.mxu0
        %v590 = vadd.f32 %v517, %v589
        %v591 = vpop.f32.mrf.mxu0
        %v592 = vpop.f32.mrf.mxu0
        %v593 = vadd.f32 %v517, %v592
        %v594 = vpop.f32.mrf.mxu0
        %595 = vdwg.mxu0
        %v596 = vpack.c.bf16 %v494, %v494
        %v597 = vpack.c.bf16 %v497, %v497
        %v598 = vpack.c.bf16 %v502, %v502
        %v599 = vpack.c.bf16 %v505, %v505
        %v600 = vpack.c.bf16 %v582, %v582
        %v601 = vpack.c.bf16 %v585, %v585
        %v602 = vpack.c.bf16 %v590, %v590
        %v603 = vpack.c.bf16 %v593, %v593
        %v605 = vsel %vm452, %v596, 0
        %v608 = vsel %vm452, %v600, 0
        %610 = vmatprep.subr.bf16.mxu0 0
        %611 = vmatpush1.bf16.xpose.msra.mxu0 0
        %612 = vmatprep.subr.bf16.mxu0 0
        %613 = vmatpush1.bf16.xpose.msra.mxu0 0
        %614 = vmatprep.subr.bf16.mxu0 0
        %615 = vmatpush1.bf16.xpose.msra.mxu0 0
        %616 = vmatprep.subr.bf16.mxu0 0
        %617 = vmatpush1.bf16.xpose.msra.mxu0 0
        %618 = vmatprep.subr.bf16.mxu0 0
        %619 = vmatpush1.bf16.xpose.msra.mxu0 0
        %620 = vmatprep.subr.bf16.mxu0 0
        %621 = vmatpush1.bf16.xpose.msra.mxu0 0
        %622 = vmatprep.subr.bf16.mxu0 0
        %623 = vmatpush1.bf16.xpose.msra.mxu0 0
        %624 = vmatprep.subr.bf16.mxu0 0
        %625 = vmatpush1.bf16.xpose.msra.mxu0 %v608
        %626 = vmatprep.subr.bf16.mxu0 0
        %627 = vmatpush2.bf16.xpose.msra.mxu0 0
        %628 = vmatprep.subr.bf16.mxu0 0
        %629 = vmatpush2.bf16.xpose.msra.mxu0 0
        %630 = vmatprep.subr.bf16.mxu0 0
        %631 = vmatpush2.bf16.xpose.msra.mxu0 0
        %632 = vmatprep.subr.bf16.mxu0 0
        %633 = vmatpush2.bf16.xpose.msra.mxu0 0
        %634 = vmatprep.subr.bf16.mxu0 0
        %635 = vmatpush2.bf16.xpose.msra.mxu0 0
        %636 = vmatprep.subr.bf16.mxu0 0
        %637 = vmatpush2.bf16.xpose.msra.mxu0 0
        %638 = vmatprep.subr.bf16.mxu0 0
        %639 = vmatpush2.bf16.xpose.msra.mxu0 0
        %640 = vmatprep.subr.bf16.mxu0 0
        %641 = vmatpush2.bf16.xpose.msra.mxu0 0
        %642 = vmatprep.mubr.bf16.mxu0 0
        %643 = vmatmul.mubr.bf16.gmra.mxu0 %v605
        %v644 = vpop.f32.mrf.mxu0
        %v645 = vadd.f32 0.0, %v644
        %v646 = vpop.f32.mrf.mxu0
        %v647 = vpop.f32.mrf.mxu0
        %v648 = vpop.f32.mrf.mxu0
        %649 = vdwg.mxu0
        %v651 = vsel %vm452, %v597, 0
        %v654 = vsel %vm452, %v601, 0
        %656 = vmatprep.subr.bf16.mxu0 0
        %657 = vmatpush1.bf16.xpose.msra.mxu0 0
        %658 = vmatprep.subr.bf16.mxu0 0
        %659 = vmatpush1.bf16.xpose.msra.mxu0 0
        %660 = vmatprep.subr.bf16.mxu0 0
        %661 = vmatpush1.bf16.xpose.msra.mxu0 0
        %662 = vmatprep.subr.bf16.mxu0 0
        %663 = vmatpush1.bf16.xpose.msra.mxu0 0
        %664 = vmatprep.subr.bf16.mxu0 0
        %665 = vmatpush1.bf16.xpose.msra.mxu0 0
        %666 = vmatprep.subr.bf16.mxu0 0
        %667 = vmatpush1.bf16.xpose.msra.mxu0 0
        %668 = vmatprep.subr.bf16.mxu0 0
        %669 = vmatpush1.bf16.xpose.msra.mxu0 0
        %670 = vmatprep.subr.bf16.mxu0 0
        %671 = vmatpush1.bf16.xpose.msra.mxu0 %v654
        %672 = vmatprep.subr.bf16.mxu0 0
        %673 = vmatpush2.bf16.xpose.msra.mxu0 0
        %674 = vmatprep.subr.bf16.mxu0 0
        %675 = vmatpush2.bf16.xpose.msra.mxu0 0
        %676 = vmatprep.subr.bf16.mxu0 0
        %677 = vmatpush2.bf16.xpose.msra.mxu0 0
        %678 = vmatprep.subr.bf16.mxu0 0
        %679 = vmatpush2.bf16.xpose.msra.mxu0 0
        %680 = vmatprep.subr.bf16.mxu0 0
        %681 = vmatpush2.bf16.xpose.msra.mxu0 0
        %682 = vmatprep.subr.bf16.mxu0 0
        %683 = vmatpush2.bf16.xpose.msra.mxu0 0
        %684 = vmatprep.subr.bf16.mxu0 0
        %685 = vmatpush2.bf16.xpose.msra.mxu0 0
        %686 = vmatprep.subr.bf16.mxu0 0
        %687 = vmatpush2.bf16.xpose.msra.mxu0 0
        %688 = vmatprep.mubr.bf16.mxu0 0
        %689 = vmatmul.mubr.bf16.gmra.mxu0 %v651
        %v690 = vpop.f32.mrf.mxu0
        %v691 = vadd.f32 0.0, %v690
        %v692 = vpop.f32.mrf.mxu0
        %v693 = vpop.f32.mrf.mxu0
        %v694 = vpop.f32.mrf.mxu0
        %695 = vdwg.mxu0
        %v697 = vsel %vm452, %v598, 0
        %v700 = vsel %vm452, %v602, 0
        %702 = vmatprep.subr.bf16.mxu0 0
        %703 = vmatpush1.bf16.xpose.msra.mxu0 0
        %704 = vmatprep.subr.bf16.mxu0 0
        %705 = vmatpush1.bf16.xpose.msra.mxu0 0
        %706 = vmatprep.subr.bf16.mxu0 0
        %707 = vmatpush1.bf16.xpose.msra.mxu0 0
        %708 = vmatprep.subr.bf16.mxu0 0
        %709 = vmatpush1.bf16.xpose.msra.mxu0 0
        %710 = vmatprep.subr.bf16.mxu0 0
        %711 = vmatpush1.bf16.xpose.msra.mxu0 0
        %712 = vmatprep.subr.bf16.mxu0 0
        %713 = vmatpush1.bf16.xpose.msra.mxu0 0
        %714 = vmatprep.subr.bf16.mxu0 0
        %715 = vmatpush1.bf16.xpose.msra.mxu0 0
        %716 = vmatprep.subr.bf16.mxu0 0
        %717 = vmatpush1.bf16.xpose.msra.mxu0 %v700
        %718 = vmatprep.subr.bf16.mxu0 0
        %719 = vmatpush2.bf16.xpose.msra.mxu0 0
        %720 = vmatprep.subr.bf16.mxu0 0
        %721 = vmatpush2.bf16.xpose.msra.mxu0 0
        %722 = vmatprep.subr.bf16.mxu0 0
        %723 = vmatpush2.bf16.xpose.msra.mxu0 0
        %724 = vmatprep.subr.bf16.mxu0 0
        %725 = vmatpush2.bf16.xpose.msra.mxu0 0
        %726 = vmatprep.subr.bf16.mxu0 0
        %727 = vmatpush2.bf16.xpose.msra.mxu0 0
        %728 = vmatprep.subr.bf16.mxu0 0
        %729 = vmatpush2.bf16.xpose.msra.mxu0 0
        %730 = vmatprep.subr.bf16.mxu0 0
        %731 = vmatpush2.bf16.xpose.msra.mxu0 0
        %732 = vmatprep.subr.bf16.mxu0 0
        %733 = vmatpush2.bf16.xpose.msra.mxu0 0
        %734 = vmatprep.mubr.bf16.mxu0 0
        %735 = vmatmul.mubr.bf16.gmra.mxu0 %v697
        %v736 = vpop.f32.mrf.mxu0
        %v737 = vadd.f32 0.0, %v736
        %v738 = vpop.f32.mrf.mxu0
        %v739 = vpop.f32.mrf.mxu0
        %v740 = vpop.f32.mrf.mxu0
        %741 = vdwg.mxu0
        %v743 = vsel %vm452, %v599, 0
        %v746 = vsel %vm452, %v603, 0
        %748 = vmatprep.subr.bf16.mxu0 0
        %749 = vmatpush1.bf16.xpose.msra.mxu0 0
        %750 = vmatprep.subr.bf16.mxu0 0
        %751 = vmatpush1.bf16.xpose.msra.mxu0 0
        %752 = vmatprep.subr.bf16.mxu0 0
        %753 = vmatpush1.bf16.xpose.msra.mxu0 0
        %754 = vmatprep.subr.bf16.mxu0 0
        %755 = vmatpush1.bf16.xpose.msra.mxu0 0
        %756 = vmatprep.subr.bf16.mxu0 0
        %757 = vmatpush1.bf16.xpose.msra.mxu0 0
        %758 = vmatprep.subr.bf16.mxu0 0
        %759 = vmatpush1.bf16.xpose.msra.mxu0 0
        %760 = vmatprep.subr.bf16.mxu0 0
        %761 = vmatpush1.bf16.xpose.msra.mxu0 0
        %762 = vmatprep.subr.bf16.mxu0 0
        %763 = vmatpush1.bf16.xpose.msra.mxu0 %v746
        %764 = vmatprep.subr.bf16.mxu0 0
        %765 = vmatpush2.bf16.xpose.msra.mxu0 0
        %766 = vmatprep.subr.bf16.mxu0 0
        %767 = vmatpush2.bf16.xpose.msra.mxu0 0
        %768 = vmatprep.subr.bf16.mxu0 0
        %769 = vmatpush2.bf16.xpose.msra.mxu0 0
        %770 = vmatprep.subr.bf16.mxu0 0
        %771 = vmatpush2.bf16.xpose.msra.mxu0 0
        %772 = vmatprep.subr.bf16.mxu0 0
        %773 = vmatpush2.bf16.xpose.msra.mxu0 0
        %774 = vmatprep.subr.bf16.mxu0 0
        %775 = vmatpush2.bf16.xpose.msra.mxu0 0
        %776 = vmatprep.subr.bf16.mxu0 0
        %777 = vmatpush2.bf16.xpose.msra.mxu0 0
        %778 = vmatprep.subr.bf16.mxu0 0
        %779 = vmatpush2.bf16.xpose.msra.mxu0 0
        %780 = vmatprep.mubr.bf16.mxu0 0
        %781 = vmatmul.mubr.bf16.gmra.mxu0 %v743
        %v782 = vpop.f32.mrf.mxu0
        %v783 = vadd.f32 0.0, %v782
        %v784 = vpop.f32.mrf.mxu0
        %v785 = vpop.f32.mrf.mxu0
        %v786 = vpop.f32.mrf.mxu0
        %787 = vdwg.mxu0
        %v788 = vmul.f32 %v645, 0.17677669
        %v789 = vmul.f32 %v691, 0.17677669
        %v790 = vmul.f32 %v737, 0.17677669
        %v791 = vmul.f32 %v783, 0.17677669
        %vm792 = vcmask 64512
        %v793 = vsel %vm792, %v788, -inf
        %794 = vmax.xlane.f32.xlu0 %v793
        %v795 = vpop.xlane.xlu0 %794
        %v796 = vsel %vm792, %v789, -inf
        %797 = vmax.xlane.f32.xlu0 %v796
        %v798 = vpop.xlane.xlu0 %797
        %v799 = vsel %vm792, %v790, -inf
        %800 = vmax.xlane.f32.xlu0 %v799
        %v801 = vpop.xlane.xlu0 %800
        %v802 = vsel %vm792, %v791, -inf
        %803 = vmax.xlane.f32.xlu0 %v802
        %v804 = vpop.xlane.xlu0 %803
        %v805 = vsub.f32 %v788, %v795
        %v806 = vsub.f32 %v789, %v798
        %v807 = vsub.f32 %v790, %v801
        %v808 = vsub.f32 %v791, %v804
        %v809 = vmul.f32 %v805, 1.442695
        %v810 = vpow.pop %v809
        %v811 = vmul.f32 %v806, 1.442695
        %v812 = vpow.pop %v811
        %v813 = vmul.f32 %v807, 1.442695
        %v814 = vpow.pop %v813
        %v815 = vmul.f32 %v808, 1.442695
        %v816 = vpow.pop %v815
        %v817 = vsel %vm792, %v810, 0.0
        %818 = vadd.xlane.f32.xlu0 %v817
        %v819 = vpop.xlane.xlu0 %818
        %v820 = vsel %vm792, %v812, 0.0
        %821 = vadd.xlane.f32.xlu0 %v820
        %v822 = vpop.xlane.xlu0 %821
        %v823 = vsel %vm792, %v814, 0.0
        %824 = vadd.xlane.f32.xlu0 %v823
        %v825 = vpop.xlane.xlu0 %824
        %v826 = vsel %vm792, %v816, 0.0
        %827 = vadd.xlane.f32.xlu0 %v826
        %v828 = vpop.xlane.xlu0 %827
        %v829 = vrcp.pop %v819
        %v830 = vrcp.pop %v822
        %v831 = vrcp.pop %v825
        %v832 = vrcp.pop %v828
        %v833 = vmul.f32 %v810, %v829
        %v834 = vmul.f32 %v812, %v830
        %v835 = vmul.f32 %v814, %v831
        %v836 = vmul.f32 %v816, %v832
        %v837 = vpack.c.bf16 %v833, %v833
        %v838 = vpack.c.bf16 %v834, %v834
        %v839 = vpack.c.bf16 %v835, %v835
        %v840 = vpack.c.bf16 %v836, %v836
        %842 = vrot.lane.b32.xlu0 %v600, 96
        %v843 = vpop.permute.xlu0 %842
        %v845 = vsel %vm792, %v837, 0
        %vm847 = vcmask 1043456
        %v849 = vsel %vm847, %v843, 0
        %851 = vmatprep.subr.bf16.mxu0 0
        %852 = vmatpush1.bf16.msra.mxu0 0
        %853 = vmatprep.subr.bf16.mxu0 0
        %854 = vmatpush1.bf16.msra.mxu0 0
        %855 = vmatprep.subr.bf16.mxu0 0
        %856 = vmatpush1.bf16.msra.mxu0 0
        %857 = vmatprep.subr.bf16.mxu0 0
        %858 = vmatpush1.bf16.msra.mxu0 0
        %859 = vmatprep.subr.bf16.mxu0 0
        %860 = vmatpush1.bf16.msra.mxu0 0
        %861 = vmatprep.subr.bf16.mxu0 0
        %862 = vmatpush1.bf16.msra.mxu0 0
        %863 = vmatprep.subr.bf16.mxu0 0
        %864 = vmatpush1.bf16.msra.mxu0 0
        %865 = vmatprep.subr.bf16.mxu0 0
        %866 = vmatpush1.bf16.msra.mxu0 %v849
        %867 = vmatprep.subr.bf16.mxu0 0
        %868 = vmatpush2.bf16.msra.mxu0 0
        %869 = vmatprep.subr.bf16.mxu0 0
        %870 = vmatpush2.bf16.msra.mxu0 0
        %871 = vmatprep.subr.bf16.mxu0 0
        %872 = vmatpush2.bf16.msra.mxu0 0
        %873 = vmatprep.subr.bf16.mxu0 0
        %874 = vmatpush2.bf16.msra.mxu0 0
        %875 = vmatprep.subr.bf16.mxu0 0
        %876 = vmatpush2.bf16.msra.mxu0 0
        %877 = vmatprep.subr.bf16.mxu0 0
        %878 = vmatpush2.bf16.msra.mxu0 0
        %879 = vmatprep.subr.bf16.mxu0 0
        %880 = vmatpush2.bf16.msra.mxu0 0
        %881 = vmatprep.subr.bf16.mxu0 0
        %882 = vmatpush2.bf16.msra.mxu0 0
        %883 = vmatprep.mubr.bf16.mxu0 0
        %884 = vmatmul.mubr.bf16.gmra.mxu0 %v845
        %v885 = vpop.f32.mrf.mxu0
        %v886 = vadd.f32 0.0, %v885
        %v887 = vpop.f32.mrf.mxu0
        %v888 = vpop.f32.mrf.mxu0
        %v889 = vpop.f32.mrf.mxu0
        %890 = vdwg.mxu0
        %892 = vrot.lane.b32.xlu0 %v601, 96
        %v893 = vpop.permute.xlu0 %892
        %v895 = vsel %vm792, %v838, 0
        %v898 = vsel %vm847, %v893, 0
        %900 = vmatprep.subr.bf16.mxu0 0
        %901 = vmatpush1.bf16.msra.mxu0 0
        %902 = vmatprep.subr.bf16.mxu0 0
        %903 = vmatpush1.bf16.msra.mxu0 0
        %904 = vmatprep.subr.bf16.mxu0 0
        %905 = vmatpush1.bf16.msra.mxu0 0
        %906 = vmatprep.subr.bf16.mxu0 0
        %907 = vmatpush1.bf16.msra.mxu0 0
        %908 = vmatprep.subr.bf16.mxu0 0
        %909 = vmatpush1.bf16.msra.mxu0 0
        %910 = vmatprep.subr.bf16.mxu0 0
        %911 = vmatpush1.bf16.msra.mxu0 0
        %912 = vmatprep.subr.bf16.mxu0 0
        %913 = vmatpush1.bf16.msra.mxu0 0
        %914 = vmatprep.subr.bf16.mxu0 0
        %915 = vmatpush1.bf16.msra.mxu0 %v898
        %916 = vmatprep.subr.bf16.mxu0 0
        %917 = vmatpush2.bf16.msra.mxu0 0
        %918 = vmatprep.subr.bf16.mxu0 0
        %919 = vmatpush2.bf16.msra.mxu0 0
        %920 = vmatprep.subr.bf16.mxu0 0
        %921 = vmatpush2.bf16.msra.mxu0 0
        %922 = vmatprep.subr.bf16.mxu0 0
        %923 = vmatpush2.bf16.msra.mxu0 0
        %924 = vmatprep.subr.bf16.mxu0 0
        %925 = vmatpush2.bf16.msra.mxu0 0
        %926 = vmatprep.subr.bf16.mxu0 0
        %927 = vmatpush2.bf16.msra.mxu0 0
        %928 = vmatprep.subr.bf16.mxu0 0
        %929 = vmatpush2.bf16.msra.mxu0 0
        %930 = vmatprep.subr.bf16.mxu0 0
        %931 = vmatpush2.bf16.msra.mxu0 0
        %932 = vmatprep.mubr.bf16.mxu0 0
        %933 = vmatmul.mubr.bf16.gmra.mxu0 %v895
        %v934 = vpop.f32.mrf.mxu0
        %v935 = vadd.f32 0.0, %v934
        %v936 = vpop.f32.mrf.mxu0
        %v937 = vpop.f32.mrf.mxu0
        %v938 = vpop.f32.mrf.mxu0
        %939 = vdwg.mxu0
        %941 = vrot.lane.b32.xlu0 %v602, 96
        %v942 = vpop.permute.xlu0 %941
        %v944 = vsel %vm792, %v839, 0
        %v947 = vsel %vm847, %v942, 0
        %949 = vmatprep.subr.bf16.mxu0 0
        %950 = vmatpush1.bf16.msra.mxu0 0
        %951 = vmatprep.subr.bf16.mxu0 0
        %952 = vmatpush1.bf16.msra.mxu0 0
        %953 = vmatprep.subr.bf16.mxu0 0
        %954 = vmatpush1.bf16.msra.mxu0 0
        %955 = vmatprep.subr.bf16.mxu0 0
        %956 = vmatpush1.bf16.msra.mxu0 0
        %957 = vmatprep.subr.bf16.mxu0 0
        %958 = vmatpush1.bf16.msra.mxu0 0
        %959 = vmatprep.subr.bf16.mxu0 0
        %960 = vmatpush1.bf16.msra.mxu0 0
        %961 = vmatprep.subr.bf16.mxu0 0
        %962 = vmatpush1.bf16.msra.mxu0 0
        %963 = vmatprep.subr.bf16.mxu0 0
        %964 = vmatpush1.bf16.msra.mxu0 %v947
        %965 = vmatprep.subr.bf16.mxu0 0
        %966 = vmatpush2.bf16.msra.mxu0 0
        %967 = vmatprep.subr.bf16.mxu0 0
        %968 = vmatpush2.bf16.msra.mxu0 0
        %969 = vmatprep.subr.bf16.mxu0 0
        %970 = vmatpush2.bf16.msra.mxu0 0
        %971 = vmatprep.subr.bf16.mxu0 0
        %972 = vmatpush2.bf16.msra.mxu0 0
        %973 = vmatprep.subr.bf16.mxu0 0
        %974 = vmatpush2.bf16.msra.mxu0 0
        %975 = vmatprep.subr.bf16.mxu0 0
        %976 = vmatpush2.bf16.msra.mxu0 0
        %977 = vmatprep.subr.bf16.mxu0 0
        %978 = vmatpush2.bf16.msra.mxu0 0
        %979 = vmatprep.subr.bf16.mxu0 0
        %980 = vmatpush2.bf16.msra.mxu0 0
        %981 = vmatprep.mubr.bf16.mxu0 0
        %982 = vmatmul.mubr.bf16.gmra.mxu0 %v944
        %v983 = vpop.f32.mrf.mxu0
        %v984 = vadd.f32 0.0, %v983
        %v985 = vpop.f32.mrf.mxu0
        %v986 = vpop.f32.mrf.mxu0
        %v987 = vpop.f32.mrf.mxu0
        %988 = vdwg.mxu0
        %990 = vrot.lane.b32.xlu0 %v603, 96
        %v991 = vpop.permute.xlu0 %990
        %v993 = vsel %vm792, %v840, 0
        %v996 = vsel %vm847, %v991, 0
        %998 = vmatprep.subr.bf16.mxu0 0
        %999 = vmatpush1.bf16.msra.mxu0 0
        %1000 = vmatprep.subr.bf16.mxu0 0
        %1001 = vmatpush1.bf16.msra.mxu0 0
        %1002 = vmatprep.subr.bf16.mxu0 0
        %1003 = vmatpush1.bf16.msra.mxu0 0
        %1004 = vmatprep.subr.bf16.mxu0 0
        %1005 = vmatpush1.bf16.msra.mxu0 0
        %1006 = vmatprep.subr.bf16.mxu0 0
        %1007 = vmatpush1.bf16.msra.mxu0 0
        %1008 = vmatprep.subr.bf16.mxu0 0
        %1009 = vmatpush1.bf16.msra.mxu0 0
        %1010 = vmatprep.subr.bf16.mxu0 0
        %1011 = vmatpush1.bf16.msra.mxu0 0
        %1012 = vmatprep.subr.bf16.mxu0 0
        %1013 = vmatpush1.bf16.msra.mxu0 %v996
        %1014 = vmatprep.subr.bf16.mxu0 0
        %1015 = vmatpush2.bf16.msra.mxu0 0
        %1016 = vmatprep.subr.bf16.mxu0 0
        %1017 = vmatpush2.bf16.msra.mxu0 0
        %1018 = vmatprep.subr.bf16.mxu0 0
        %1019 = vmatpush2.bf16.msra.mxu0 0
        %1020 = vmatprep.subr.bf16.mxu0 0
        %1021 = vmatpush2.bf16.msra.mxu0 0
        %1022 = vmatprep.subr.bf16.mxu0 0
        %1023 = vmatpush2.bf16.msra.mxu0 0
        %1024 = vmatprep.subr.bf16.mxu0 0
        %1025 = vmatpush2.bf16.msra.mxu0 0
        %1026 = vmatprep.subr.bf16.mxu0 0
        %1027 = vmatpush2.bf16.msra.mxu0 0
        %1028 = vmatprep.subr.bf16.mxu0 0
        %1029 = vmatpush2.bf16.msra.mxu0 0
        %1030 = vmatprep.mubr.bf16.mxu0 0
        %1031 = vmatmul.mubr.bf16.gmra.mxu0 %v993
        %v1032 = vpop.f32.mrf.mxu0
        %v1033 = vadd.f32 0.0, %v1032
        %v1034 = vpop.f32.mrf.mxu0
        %v1035 = vpop.f32.mrf.mxu0
        %v1036 = vpop.f32.mrf.mxu0
        %1037 = vdwg.mxu0
        %v1038 = vpack.c.bf16 %v935, %v886
        %v1039 = vpack.c.bf16 %v1033, %v984
        %v1040 = vld [vmem:[#allocation10] sm:$0xf]
        %v1041 = vld [vmem:[#allocation10 + $0x4] sm:$0xf]
        %v1042 = vld [vmem:[#allocation10 + $0x8] sm:$0xf]
        %v1043 = vld [vmem:[#allocation10 + $0xc] sm:$0xf]
        %v1044 = vld [vmem:[%s7] sm:$0x1]
        %v1046 = vlaneseq
        %v1047 = vshrl.u32 %v1046, 7
        %v1048 = vsub.s32 0, %v1047
        %v1049 = vrot.slane %v1044, %v1048
        %v1055 = vunpack.c.l.b16 %v1040
        %v1056 = vunpack.c.l.b16 %v1041
        %v1057 = vunpack.c.l.b16 %v1042
        %v1058 = vunpack.c.l.b16 %v1043
        %v1059 = vpack.c.b16 %v1056, %v1055
        %v1060 = vpack.c.b16 %v1058, %v1057
        %v1064 = vsel %vm452, %v1038, 0
        %v1067 = vsel %vm452, %v1039, 0
        %1069 = vmatprep.subr.bf16.mxu0 0
        %1070 = vmatpush1.bf16.msra.mxu0 0
        %1071 = vmatprep.subr.bf16.mxu0 0
        %1072 = vmatpush1.bf16.msra.mxu0 0
        %1073 = vmatprep.subr.bf16.mxu0 0
        %1074 = vmatpush1.bf16.msra.mxu0 0
        %1075 = vmatprep.subr.bf16.mxu0 0
        %1076 = vmatpush1.bf16.msra.mxu0 0
        %1077 = vmatprep.subr.bf16.mxu0 0
        %1078 = vmatpush1.bf16.msra.mxu0 0
        %1079 = vmatprep.subr.bf16.mxu0 0
        %1080 = vmatpush1.bf16.msra.mxu0 0
        %1081 = vmatprep.subr.bf16.mxu0 0
        %1082 = vmatpush1.bf16.msra.mxu0 %v1060
        %1083 = vmatprep.subr.bf16.mxu0 0
        %1084 = vmatpush1.bf16.msra.mxu0 %v1059
        %1085 = vmatprep.subr.bf16.mxu0 0
        %1086 = vmatpush2.bf16.msra.mxu0 0
        %1087 = vmatprep.subr.bf16.mxu0 0
        %1088 = vmatpush2.bf16.msra.mxu0 0
        %1089 = vmatprep.subr.bf16.mxu0 0
        %1090 = vmatpush2.bf16.msra.mxu0 0
        %1091 = vmatprep.subr.bf16.mxu0 0
        %1092 = vmatpush2.bf16.msra.mxu0 0
        %1093 = vmatprep.subr.bf16.mxu0 0
        %1094 = vmatpush2.bf16.msra.mxu0 0
        %1095 = vmatprep.subr.bf16.mxu0 0
        %1096 = vmatpush2.bf16.msra.mxu0 0
        %1097 = vmatprep.subr.bf16.mxu0 0
        %1098 = vmatpush2.bf16.msra.mxu0 0
        %1099 = vmatprep.subr.bf16.mxu0 0
        %1100 = vmatpush2.bf16.msra.mxu0 0
        %1101 = vmatprep.mubr.bf16.mxu0 0
        %1102 = vmatmul.mubr.bf16.gmra.mxu0 %v1064
        %v1103 = vpop.f32.mrf.mxu0
        %v1104 = vadd.f32 %v1049, %v1103
        %v1105 = vpop.f32.mrf.mxu0
        %v1106 = vpop.f32.mrf.mxu0
        %v1107 = vadd.f32 %v1049, %v1106
        %v1108 = vpop.f32.mrf.mxu0
        %1109 = vmatprep.mubr.bf16.mxu0 0
        %1110 = vmatmul.mubr.bf16.gmra.mxu0 %v1067
        %v1111 = vpop.f32.mrf.mxu0
        %v1112 = vadd.f32 %v1049, %v1111
        %v1113 = vpop.f32.mrf.mxu0
        %v1114 = vpop.f32.mrf.mxu0
        %v1115 = vadd.f32 %v1049, %v1114
        %v1116 = vpop.f32.mrf.mxu0
        %1117 = vdwg.mxu0
        %1118 = vmax.xlane.f32.xlu0 %v1104
        %v1119 = vpop.xlane.xlu0 %1118
        %1120 = vmax.xlane.f32.xlu0 %v1107
        %v1121 = vpop.xlane.xlu0 %1120
        %1122 = vmax.xlane.f32.xlu0 %v1112
        %v1123 = vpop.xlane.xlu0 %1122
        %1124 = vmax.xlane.f32.xlu0 %v1115
        %v1125 = vpop.xlane.xlu0 %1124
        %v1126 = vsub.f32 %v1104, %v1119
        %v1127 = vsub.f32 %v1107, %v1121
        %v1128 = vsub.f32 %v1112, %v1123
        %v1129 = vsub.f32 %v1115, %v1125
        %v1130 = vmul.f32 %v1126, 1.442695
        %v1131 = vpow.pop %v1130
        %v1132 = vmul.f32 %v1127, 1.442695
        %v1133 = vpow.pop %v1132
        %v1134 = vmul.f32 %v1128, 1.442695
        %v1135 = vpow.pop %v1134
        %v1136 = vmul.f32 %v1129, 1.442695
        %v1137 = vpow.pop %v1136
        %1138 = vadd.xlane.f32.xlu0 %v1131
        %v1139 = vpop.xlane.xlu0 %1138
        %1140 = vadd.xlane.f32.xlu0 %v1133
        %v1141 = vpop.xlane.xlu0 %1140
        %1142 = vadd.xlane.f32.xlu0 %v1135
        %v1143 = vpop.xlane.xlu0 %1142
        %1144 = vadd.xlane.f32.xlu0 %v1137
        %v1145 = vpop.xlane.xlu0 %1144
        %v1146 = vrcp.pop %v1139
        %v1147 = vrcp.pop %v1141
        %v1148 = vrcp.pop %v1143
        %v1149 = vrcp.pop %v1145
        %v1150 = vmul.f32 %v1131, %v1146
        %v1151 = vmul.f32 %v1133, %v1147
        %v1152 = vmul.f32 %v1135, %v1148
        %v1153 = vmul.f32 %v1137, %v1149
        %1154 = vst [vmem:[%s406] sm:$0xff] %v1150
        %1155 = vst [vmem:[%s406 + $0x8] sm:$0xff] %v1151
        %1156 = vst [vmem:[%s406 + $0x10] sm:$0xff] %v1152
        %1157 = vst [vmem:[%s406 + $0x18] sm:$0xff] %v1153
        %s1158 = sand.u32 %s215, 1
        %s1159 = scalar_lea.sflag [#allocation4], %s1158
        %s1160 = sand.u32 %s215, 1
        %s1161 = smul.addr %s1160, 32
        %s1162 = scalar_lea.vmem [#allocation11], %s1161
        // Predicated region
        $region73: #{tpu_custom_call.1} parent=51 // pred_check
          %p1163 = pneg %p225
        $region74: #{tpu_custom_call.1} parent=51 // pred_check_branch
          %1165 = sbr.rel (%p1163) target = $region76
        $region75: #{tpu_custom_call.1} parent=51 // pred_region
          %s1166 = smul.u32 4, %s29
          %s1168 = ssub.s32 512, 512
          %1169 = vsyncadd %s1159, %s1168
          %s1170 = smul.addr %s1166, 128
          %s1171 = scalar_lea.hbm %s8, %s1170
          %s1172 = sshll.u32 %s1162, 4
          %s1173 = int_to_ptr.vmem [resolvable:$true] %s1172
          %1178 = dma.vmem_to_hbm [thread:$0]  %s1173, 512, %s1171, %s1159, 128, 128, 8
        $region76: #{tpu_custom_call.1} parent=51 // pred_fallthru
          _
      $region52: #{tpu_custom_call.1} parent=5 // pred_fallthru
        _
      %p1179 = scmp.le.s32.totalorder 2, %s24
      // Predicated region
      $region77: #{tpu_custom_call.1} parent=5 // pred_check
        %p1180 = pneg %p1179
      $region78: #{tpu_custom_call.1} parent=5 // pred_check_branch
        %1182 = sbr.rel (%p1180) target = $region80
      $region79: #{tpu_custom_call.1} parent=5 // pred_region
        %s1183 = ssub.s32 %s24, 2
        // Predicated region
        $region81: #{tpu_custom_call.1} parent=79 // pred_check
          %p1184 = pneg %p231
        $region82: #{tpu_custom_call.1} parent=79 // pred_check_branch
          %1186 = sbr.rel (%p1184) target = $region84
        $region83: #{tpu_custom_call.1} parent=79 // pred_region
          %s1187 = sand.u32 %s216, 1
          %s1188 = scalar_lea.sflag [#allocation4], %s1187
          %s1189 = sand.u32 %s216, 1
          %s1190 = smul.addr %s1189, 32
          %s1191 = scalar_lea.vmem [#allocation11], %s1190
          %1192 = dma.done %s1188, 512
        $region84: #{tpu_custom_call.1} parent=79 // pred_fallthru
          _
      $region80: #{tpu_custom_call.1} parent=5 // pred_fallthru
        _
    $region6: #{tpu_custom_call.1} parent=1 // loop_footer
      %s28 = sadd.s32 1, %s24
    $region7: #{tpu_custom_call.1} parent=1 // loop_footer_branch
      %23 = sbr.rel target = $region3
    $region8: #{tpu_custom_call.1} parent=1 // loop_exit
      _
    %1193 = vsyncpa [#allocation3], 1
    %s1194 = scalar_lea.sflag [#allocation3], 1
    %1195 = vsyncpa %s1194, 1
    %1196 = vsyncpa [#allocation6], 1
    %s1197 = scalar_lea.sflag [#allocation6], 1
    %1198 = vsyncpa %s1197, 1
    %1199 = vsyncpa [#allocation9], 1
    %1200 = vsyncpa [#allocation4], 1
    %s1201 = scalar_lea.sflag [#allocation4], 1
    %1202 = vsyncpa %s1201, 1

</llo_original>
